<compile_context>
chip_gen: v5e
topology: v5e:2x2
jax: 0.10.0
libtpu: 0.0.40
codegen_flags: <defaults>
</compile_context>

<pallas_src>
import jax
import jax.numpy as jnp
from jax.experimental import pallas as pl
from jax.experimental.pallas import tpu as pltpu


def _sobel_kernel(x_ref, o_ref):
    # x_ref: (Bt, C, H, W) ; o_ref: (Bt, 1, H-2, W)  (last 2 cols are garbage)
    Bt, C, H, W = x_ref.shape
    for b in range(Bt):  # Bt is small & static -> fully unrolled
        s = jnp.sum(x_ref[b].astype(jnp.float32), axis=0)      # (H, W)
        top = s[0:H - 2, :]
        mid = s[1:H - 1, :]
        bot = s[2:H, :]
        v = top + 2.0 * mid + bot          # vertical smooth  (for Sobel-x)
        d = bot - top                      # vertical diff    (for Sobel-y)
        # Lane rotations: result[:, j] = src[:, (j + k) % W]; wrap-around
        # columns are trimmed by the wrapper, so only j < W-2 must be valid.
        v2 = pltpu.roll(v, shift=W - 2, axis=1)   # v[:, j+2]
        d1 = pltpu.roll(d, shift=W - 1, axis=1)   # d[:, j+1]
        d2 = pltpu.roll(d, shift=W - 2, axis=1)   # d[:, j+2]
        gx = v2 - v
        gy = d + 2.0 * d1 + d2
        o_ref[b, 0] = (jnp.abs(gx) + jnp.abs(gy)).astype(o_ref.dtype)


def _pick_batch_tile(N, C, H, W, itemsize, vmem_block_budget=8 << 20, max_bt=8):
    """Pack as many images per grid step as fit a single-buffer VMEM budget."""
    per_img = C * H * W * itemsize + (H - 2) * W * itemsize
    fit = max(1, vmem_block_budget // per_img)
    fit = min(fit, max_bt)
    bt = 1
    for cand in range(1, N + 1):
        if cand <= fit and N % cand == 0:
            bt = cand
    return bt


def gradient_net(x):
    """x: (N, C, H, W) -> (N, 1, H-2, W-2). Matches Gradient_Net.forward."""
    N, C, H, W = x.shape
    Ho, Wo = H - 2, W - 2
    Bt = _pick_batch_tile(N, C, H, W, x.dtype.itemsize)
    grid = (N // Bt,)

    # Explicit scoped-VMEM limit: double-buffered input + output blocks + slack.
    in_block_bytes = Bt * C * H * W * x.dtype.itemsize
    out_block_bytes = Bt * Ho * W * x.dtype.itemsize
    vmem_needed = 2 * (in_block_bytes + out_block_bytes) + (4 << 20)
    vmem_limit = int(min(max(vmem_needed, 32 << 20), 48 << 20))

    # TODO(synk): for very large frames (e.g. 1080p, C>=3 on v7x's 64 MiB VMEM),
    # add an H-tile grid axis with a 2-row halo via manual make_async_copy.
    padded = pl.pallas_call(
        _sobel_kernel,
        out_shape=jax.ShapeDtypeStruct((N, 1, Ho, W), x.dtype),
        grid_spec=pltpu.PrefetchScalarGridSpec(
            num_scalar_prefetch=0,
            grid=grid,
            in_specs=[pl.BlockSpec((Bt, C, H, W), lambda n: (n, 0, 0, 0))],
            out_specs=pl.BlockSpec((Bt, 1, Ho, W), lambda n: (n, 0, 0, 0)),
        ),
        compiler_params=pltpu.CompilerParams(
            dimension_semantics=("parallel",),
            vmem_limit_bytes=vmem_limit),
    )(x)
    # The last 2 output columns are roll wrap-around garbage; trim them here so
    # the in-kernel store stays a full-width lane-dense block.
    return padded[:, :, :, :Wo]


def gradient_net_ref(x):
    """Pure-JAX reference (mirrors F.conv2d with replicated Sobel kernels)."""
    single_x = jnp.array([[-1.0, 0.0, 1.0],
                          [-2.0, 0.0, 2.0],
                          [-1.0, 0.0, 1.0]], dtype=jnp.float32)
    single_y = jnp.array([[-1.0, -2.0, -1.0],
                          [0.0, 0.0, 0.0],
                          [1.0, 2.0, 1.0]], dtype=jnp.float32)
    C = x.shape[1]
    wx = jnp.tile(single_x[None, None], (1, C, 1, 1))   # (1, C, 3, 3)
    wy = jnp.tile(single_y[None, None], (1, C, 1, 1))
    dn = jax.lax.conv_dimension_numbers(x.shape, wx.shape,
                                        ("NCHW", "OIHW", "NCHW"))
    gx = jax.lax.conv_general_dilated(x, wx, (1, 1), "VALID",
                                      dimension_numbers=dn)
    gy = jax.lax.conv_general_dilated(x, wy, (1, 1), "VALID",
                                      dimension_numbers=dn)
    return jnp.abs(gx) + jnp.abs(gy)


if __name__ == "__main__":
    key = jax.random.PRNGKey(0)
    # W chosen as a lane-dense 128 so the full-width output store is unmasked.
    N, C, H, W = 2, 4, 16, 128
    x = jax.random.normal(key, (N, C, H, W), dtype=jnp.float32)

    out = jax.block_until_ready(gradient_net(x))
    ref = gradient_net_ref(x)

    assert out.shape == (N, 1, H - 2, W - 2), out.shape
    max_err = float(jnp.max(jnp.abs(out - ref)))
    assert jnp.allclose(out, ref, atol=1e-3, rtol=1e-4), max_err
    print("KERNEL_OK")
</pallas_src>

<mosaic_0001>
module attributes {stable_mosaic.version = 11 : i64} {
  func.func @_sobel_kernel(%arg0: i32, %arg1: memref<2x4x16x128xf32, #tpu.memory_space<vmem>>, %arg2: memref<2x1x14x128xf32, #tpu.memory_space<vmem>>) attributes {dimension_semantics = [#tpu.dimension_semantics<parallel>], iteration_bounds = array<i64: 1>, scalar_prefetch = 0 : i64, scratch_operands = 0 : i64, tpu.core_type = #tpu.core_type<tc>, window_params = [{transform_indices = @transform_0, window_bounds = array<i64: 2, 4, 16, 128>}, {transform_indices = @transform_1, window_bounds = array<i64: 2, 1, 14, 128>}]} {
    %c0 = arith.constant 0 : index
    %c0_0 = arith.constant 0 : index
    %c0_1 = arith.constant 0 : index
    %c0_2 = arith.constant 0 : index
    %0 = vector.load %arg1[%c0, %c0_0, %c0_1, %c0_2] : memref<2x4x16x128xf32, #tpu.memory_space<vmem>>, vector<1x4x16x128xf32>
    %1 = vector.shape_cast %0 : vector<1x4x16x128xf32> to vector<4x16x128xf32>
    %cst = arith.constant dense<0.000000e+00> : vector<16x128xf32>
    %2 = vector.multi_reduction <add>, %1, %cst [0] : vector<4x16x128xf32> to vector<16x128xf32>
    %3 = vector.extract_strided_slice %2 {offsets = [0, 0], sizes = [14, 128], strides = [1, 1]} : vector<16x128xf32> to vector<14x128xf32>
    %4 = vector.extract_strided_slice %2 {offsets = [1, 0], sizes = [14, 128], strides = [1, 1]} : vector<16x128xf32> to vector<14x128xf32>
    %5 = vector.extract_strided_slice %2 {offsets = [2, 0], sizes = [14, 128], strides = [1, 1]} : vector<16x128xf32> to vector<14x128xf32>
    %cst_3 = arith.constant 2.000000e+00 : f32
    %6 = vector.broadcast %cst_3 : f32 to vector<14x128xf32>
    %7 = arith.mulf %6, %4 : vector<14x128xf32>
    %8 = arith.addf %3, %7 : vector<14x128xf32>
    %9 = arith.addf %8, %5 : vector<14x128xf32>
    %10 = arith.subf %5, %3 : vector<14x128xf32>
    %c126_i32 = arith.constant 126 : i32
    %11 = tpu.dynamic_rotate %9 by %c126_i32 dim 1 : vector<14x128xf32>, i32 -> vector<14x128xf32>
    %c127_i32 = arith.constant 127 : i32
    %12 = tpu.dynamic_rotate %10 by %c127_i32 dim 1 : vector<14x128xf32>, i32 -> vector<14x128xf32>
    %c126_i32_4 = arith.constant 126 : i32
    %13 = tpu.dynamic_rotate %10 by %c126_i32_4 dim 1 : vector<14x128xf32>, i32 -> vector<14x128xf32>
    %14 = arith.subf %11, %9 : vector<14x128xf32>
    %cst_5 = arith.constant 2.000000e+00 : f32
    %15 = vector.broadcast %cst_5 : f32 to vector<14x128xf32>
    %16 = arith.mulf %15, %12 : vector<14x128xf32>
    %17 = arith.addf %10, %16 : vector<14x128xf32>
    %18 = arith.addf %17, %13 : vector<14x128xf32>
    %19 = math.absf %14 : vector<14x128xf32>
    %20 = math.absf %18 : vector<14x128xf32>
    %21 = arith.addf %19, %20 : vector<14x128xf32>
    %c0_6 = arith.constant 0 : index
    %c0_7 = arith.constant 0 : index
    %c0_8 = arith.constant 0 : index
    %c0_9 = arith.constant 0 : index
    %22 = vector.load %arg2[%c0_6, %c0_7, %c0_8, %c0_9] : memref<2x1x14x128xf32, #tpu.memory_space<vmem>>, vector<1x1x14x128xf32>
    %23 = vector.shape_cast %22 : vector<1x1x14x128xf32> to vector<14x128xf32>
    %24 = vector.shape_cast %21 : vector<14x128xf32> to vector<1x1x14x128xf32>
    tpu.vector_store %arg2[%c0_6, %c0_7, %c0_8, %c0_9], %24 {strides = array<i32>} : memref<2x1x14x128xf32, #tpu.memory_space<vmem>>, vector<1x1x14x128xf32>,
    %c1 = arith.constant 1 : index
    %c0_10 = arith.constant 0 : index
    %c0_11 = arith.constant 0 : index
    %c0_12 = arith.constant 0 : index
    %25 = vector.load %arg1[%c1, %c0_10, %c0_11, %c0_12] : memref<2x4x16x128xf32, #tpu.memory_space<vmem>>, vector<1x4x16x128xf32>
    %26 = vector.shape_cast %25 : vector<1x4x16x128xf32> to vector<4x16x128xf32>
    %cst_13 = arith.constant dense<0.000000e+00> : vector<16x128xf32>
    %27 = vector.multi_reduction <add>, %26, %cst_13 [0] : vector<4x16x128xf32> to vector<16x128xf32>
    %28 = vector.extract_strided_slice %27 {offsets = [0, 0], sizes = [14, 128], strides = [1, 1]} : vector<16x128xf32> to vector<14x128xf32>
    %29 = vector.extract_strided_slice %27 {offsets = [1, 0], sizes = [14, 128], strides = [1, 1]} : vector<16x128xf32> to vector<14x128xf32>
    %30 = vector.extract_strided_slice %27 {offsets = [2, 0], sizes = [14, 128], strides = [1, 1]} : vector<16x128xf32> to vector<14x128xf32>
    %cst_14 = arith.constant 2.000000e+00 : f32
    %31 = vector.broadcast %cst_14 : f32 to vector<14x128xf32>
    %32 = arith.mulf %31, %29 : vector<14x128xf32>
    %33 = arith.addf %28, %32 : vector<14x128xf32>
    %34 = arith.addf %33, %30 : vector<14x128xf32>
    %35 = arith.subf %30, %28 : vector<14x128xf32>
    %c126_i32_15 = arith.constant 126 : i32
    %36 = tpu.dynamic_rotate %34 by %c126_i32_15 dim 1 : vector<14x128xf32>, i32 -> vector<14x128xf32>
    %c127_i32_16 = arith.constant 127 : i32
    %37 = tpu.dynamic_rotate %35 by %c127_i32_16 dim 1 : vector<14x128xf32>, i32 -> vector<14x128xf32>
    %c126_i32_17 = arith.constant 126 : i32
    %38 = tpu.dynamic_rotate %35 by %c126_i32_17 dim 1 : vector<14x128xf32>, i32 -> vector<14x128xf32>
    %39 = arith.subf %36, %34 : vector<14x128xf32>
    %cst_18 = arith.constant 2.000000e+00 : f32
    %40 = vector.broadcast %cst_18 : f32 to vector<14x128xf32>
    %41 = arith.mulf %40, %37 : vector<14x128xf32>
    %42 = arith.addf %35, %41 : vector<14x128xf32>
    %43 = arith.addf %42, %38 : vector<14x128xf32>
    %44 = math.absf %39 : vector<14x128xf32>
    %45 = math.absf %43 : vector<14x128xf32>
    %46 = arith.addf %44, %45 : vector<14x128xf32>
    %c1_19 = arith.constant 1 : index
    %c0_20 = arith.constant 0 : index
    %c0_21 = arith.constant 0 : index
    %c0_22 = arith.constant 0 : index
    %47 = vector.load %arg2[%c1_19, %c0_20, %c0_21, %c0_22] : memref<2x1x14x128xf32, #tpu.memory_space<vmem>>, vector<1x1x14x128xf32>
    %48 = vector.shape_cast %47 : vector<1x1x14x128xf32> to vector<14x128xf32>
    %49 = vector.shape_cast %46 : vector<14x128xf32> to vector<1x1x14x128xf32>
    tpu.vector_store %arg2[%c1_19, %c0_20, %c0_21, %c0_22], %49 {strides = array<i32>} : memref<2x1x14x128xf32, #tpu.memory_space<vmem>>, vector<1x1x14x128xf32>,
    return
  }
  func.func @transform_0(%arg0: i32) -> (i32, i32, i32, i32) {
    %c0_i32 = arith.constant 0 : i32
    %c0_i32_0 = arith.constant 0 : i32
    %c0_i32_1 = arith.constant 0 : i32
    %c0_i32_2 = arith.constant 0 : i32
    return %arg0, %c0_i32, %c0_i32_0, %c0_i32_1 : i32, i32, i32, i32
  }
  func.func @transform_1(%arg0: i32) -> (i32, i32, i32, i32) {
    %c0_i32 = arith.constant 0 : i32
    %c0_i32_0 = arith.constant 0 : i32
    %c0_i32_1 = arith.constant 0 : i32
    %c0_i32_2 = arith.constant 0 : i32
    return %arg0, %c0_i32, %c0_i32_0, %c0_i32_1 : i32, i32, i32, i32
  }
}

</mosaic_0001>

<llo_original>
// kernel: tpu_custom_call.1
$region0: #{tpu_custom_call.1}
  #allocation0 [shape = 'u32[]', space=smem, size = 0x4, offset = 0x4, fixed_abs, tag = 'smem constant byte address 0x4 - core index']
  #allocation1 [shape = 'u32[72,128]{1,0:T(1,128)}', space=vmem, size = 0x9000, scoped, tag = 'internal scratch']
  %s0 = inlined_call_operand.hbm [shape: f32[2,4,16,128], index: 0, kind: input, shape index: {}]
  %s1 = inlined_call_operand.vmem [shape: f32[2,1,14,128], index: 1, kind: output, shape index: {}]
  %s2 = sld [smem:[#allocation0]]
  $region18: #{tpu_custom_call.1} parent=0
    _
  %s4 = ssub.s32 1, %s2
  %s5 = scalar_select 0, %s4, %s2
  $region1: #{tpu_custom_call.1} parent=0
    #allocation2 [shape = 'u8[65536]{0}', space=vmem, size = 0x10000, scoped, tag = 'input window, operand 0, single buffered']
    #allocation3 [shape = 's32[1]{0}', space=sflag, size = 0x4, scoped, tag = 'scoped memory for tpu_custom_call.1']
    %6 = vsyncpa [#allocation3], 0
    // Predicated region
    $region2: #{tpu_custom_call.1} parent=1 // pred_check
      _
    $region3: #{tpu_custom_call.1} parent=1 // pred_check_branch
      %8 = sbr.rel (0) target = $region5
    $region4: #{tpu_custom_call.1} parent=1 // pred_region
      %10 = vsyncadd [#allocation3], 0
      %s11 = sshll.u32 %s0, 4
      %s12 = int_to_ptr.hbm [resolvable:$true] %s11
      %s13 = sshll.u32 [#allocation2], 4
      %s14 = int_to_ptr.vmem [resolvable:$true] %s13
      %19 = dma.hbm_to_vmem [thread:$0]  %s12, 2048, %s14, [#allocation3], 128, 128, 8
    $region5: #{tpu_custom_call.1} parent=1 // pred_fallthru
      _
    // Predicated region
    $region6: #{tpu_custom_call.1} parent=1 // pred_check
      _
    $region7: #{tpu_custom_call.1} parent=1 // pred_check_branch
      %21 = sbr.rel (0) target = $region9
    $region8: #{tpu_custom_call.1} parent=1 // pred_region
      %23 = dma.done [#allocation3], 2048
    $region9: #{tpu_custom_call.1} parent=1 // pred_fallthru
      _
    %v24 = vld [vmem:[#allocation2] sm:$0xff]
    %v25 = vld [vmem:[#allocation2 + $0x8] sm:$0xff]
    %v26 = vld [vmem:[#allocation2 + $0x10] sm:$0xff]
    %v27 = vld [vmem:[#allocation2 + $0x18] sm:$0xff]
    %v28 = vld [vmem:[#allocation2 + $0x20] sm:$0xff]
    %v29 = vld [vmem:[#allocation2 + $0x28] sm:$0xff]
    %v30 = vld [vmem:[#allocation2 + $0x30] sm:$0xff]
    %v31 = vld [vmem:[#allocation2 + $0x38] sm:$0xff]
    %v32 = vadd.f32 %v24, %v26
    %v33 = vadd.f32 %v32, %v28
    %v34 = vadd.f32 %v33, %v30
    %v35 = vadd.f32 %v25, %v27
    %v36 = vadd.f32 %v35, %v29
    %v37 = vadd.f32 %v36, %v31
    %v38 = vmul.f32 %v34, 2.0
    %v39 = vmul.f32 %v37, 2.0
    %vm42 = vcmask 1046528
    %v43 = vrot.slane %v38, 1
    %v44 = vrot.slane %v39, 1
    %v45 = vsel %vm42, %v43, %v44
    %v48 = vadd.f32 %v34, %v45
    %v49 = vadd.f32 %v37, %v44
    %vm52 = vcmask 1045504
    %v53 = vrot.slane %v34, 2
    %v54 = vrot.slane %v37, 2
    %v55 = vsel %vm52, %v53, %v54
    %v58 = vadd.f32 %v48, %v55
    %v59 = vadd.f32 %v49, %v54
    %vm60 = vcmask 1041408
    %v61 = vrot.slane %v34, 6
    %v62 = vrot.slane %v37, 6
    %v63 = vsel %vm60, %v61, %v62
    %v66 = vsub.f32 %v34, %v61
    %v67 = vsub.f32 %v37, %v63
    %68 = vrot.lane.b32.xlu0 %v58, 126
    %v69 = vpop.permute.xlu0 %68
    %70 = vrot.lane.b32.xlu0 %v59, 126
    %v71 = vpop.permute.xlu0 %70
    %v74 = vrot.slane %v66, 2
    %v75 = vrot.slane %v67, 2
    %v76 = vsel %vm52, %v74, %v75
    %79 = vrot.lane.b32.xlu0 %v76, 127
    %v80 = vpop.permute.xlu0 %79
    %81 = vrot.lane.b32.xlu0 %v75, 127
    %v82 = vpop.permute.xlu0 %81
    %83 = vrot.lane.b32.xlu0 %v76, 126
    %v84 = vpop.permute.xlu0 %83
    %85 = vrot.lane.b32.xlu0 %v75, 126
    %v86 = vpop.permute.xlu0 %85
    %v87 = vsub.f32 %v69, %v58
    %v88 = vsub.f32 %v71, %v59
    %v89 = vmul.f32 %v80, 2.0
    %v90 = vmul.f32 %v82, 2.0
    %v93 = vrot.slane %v89, 6
    %v94 = vrot.slane %v90, 6
    %v95 = vsel %vm60, %v93, %v94
    %v98 = vadd.f32 %v66, %v93
    %v99 = vadd.f32 %v67, %v95
    %v102 = vrot.slane %v84, 6
    %v103 = vrot.slane %v86, 6
    %v104 = vsel %vm60, %v102, %v103
    %v107 = vadd.f32 %v98, %v102
    %v108 = vadd.f32 %v99, %v104
    %v109 = vand.u32 2147483647, %v87
    %v110 = vand.u32 2147483647, %v88
    %v111 = vand.u32 2147483647, %v107
    %v112 = vand.u32 2147483647, %v108
    %v115 = vrot.slane %v111, 2
    %v116 = vrot.slane %v112, 2
    %v117 = vsel %vm52, %v115, %v116
    %v120 = vadd.f32 %v109, %v117
    %v121 = vadd.f32 %v110, %v116
    %122 = vst [vmem:[%s1] sm:$0xff] %v120
    %123 = vst [vmem:[%s1 + $0x8] sm:$0x3f] %v121
    %s124 = scalar_lea.vmem [#allocation2], 64
    %v125 = vld [vmem:[%s124] sm:$0xff]
    %v126 = vld [vmem:[%s124 + $0x8] sm:$0xff]
    %v127 = vld [vmem:[%s124 + $0x10] sm:$0xff]
    %v128 = vld [vmem:[%s124 + $0x18] sm:$0xff]
    %v129 = vld [vmem:[%s124 + $0x20] sm:$0xff]
    %v130 = vld [vmem:[%s124 + $0x28] sm:$0xff]
    %v131 = vld [vmem:[%s124 + $0x30] sm:$0xff]
    %v132 = vld [vmem:[%s124 + $0x38] sm:$0xff]
    %v133 = vadd.f32 %v125, %v127
    %v134 = vadd.f32 %v133, %v129
    %v135 = vadd.f32 %v134, %v131
    %v136 = vadd.f32 %v126, %v128
    %v137 = vadd.f32 %v136, %v130
    %v138 = vadd.f32 %v137, %v132
    %v139 = vmul.f32 %v135, 2.0
    %v140 = vmul.f32 %v138, 2.0
    %v143 = vrot.slane %v139, 1
    %v144 = vrot.slane %v140, 1
    %v145 = vsel %vm42, %v143, %v144
    %v148 = vadd.f32 %v135, %v145
    %v149 = vadd.f32 %v138, %v144
    %v152 = vrot.slane %v135, 2
    %v153 = vrot.slane %v138, 2
    %v154 = vsel %vm52, %v152, %v153
    %v157 = vadd.f32 %v148, %v154
    %v158 = vadd.f32 %v149, %v153
    %v159 = vrot.slane %v135, 6
    %v160 = vrot.slane %v138, 6
    %v161 = vsel %vm60, %v159, %v160
    %v164 = vsub.f32 %v135, %v159
    %v165 = vsub.f32 %v138, %v161
    %166 = vrot.lane.b32.xlu0 %v157, 126
    %v167 = vpop.permute.xlu0 %166
    %168 = vrot.lane.b32.xlu0 %v158, 126
    %v169 = vpop.permute.xlu0 %168
    %v172 = vrot.slane %v164, 2
    %v173 = vrot.slane %v165, 2
    %v174 = vsel %vm52, %v172, %v173
    %177 = vrot.lane.b32.xlu0 %v174, 127
    %v178 = vpop.permute.xlu0 %177
    %179 = vrot.lane.b32.xlu0 %v173, 127
    %v180 = vpop.permute.xlu0 %179
    %181 = vrot.lane.b32.xlu0 %v174, 126
    %v182 = vpop.permute.xlu0 %181
    %183 = vrot.lane.b32.xlu0 %v173, 126
    %v184 = vpop.permute.xlu0 %183
    %v185 = vsub.f32 %v167, %v157
    %v186 = vsub.f32 %v169, %v158
    %v187 = vmul.f32 %v178, 2.0
    %v188 = vmul.f32 %v180, 2.0
    %v191 = vrot.slane %v187, 6
    %v192 = vrot.slane %v188, 6
    %v193 = vsel %vm60, %v191, %v192
    %v196 = vadd.f32 %v164, %v191
    %v197 = vadd.f32 %v165, %v193
    %v200 = vrot.slane %v182, 6
    %v201 = vrot.slane %v184, 6
    %v202 = vsel %vm60, %v200, %v201
    %v205 = vadd.f32 %v196, %v200
    %v206 = vadd.f32 %v197, %v202
    %v207 = vand.u32 2147483647, %v185
    %v208 = vand.u32 2147483647, %v186
    %v209 = vand.u32 2147483647, %v205
    %v210 = vand.u32 2147483647, %v206
    %v213 = vrot.slane %v209, 2
    %v214 = vrot.slane %v210, 2
    %v215 = vsel %vm52, %v213, %v214
    %v218 = vadd.f32 %v207, %v215
    %v219 = vadd.f32 %v208, %v214
    %s220 = scalar_lea.vmem %s1, 16
    %221 = vst [vmem:[%s220] sm:$0xff] %v218
    %222 = vst [vmem:[%s220 + $0x8] sm:$0x3f] %v219
    // Predicated region
    $region10: #{tpu_custom_call.1} parent=1 // pred_check
      _
    $region11: #{tpu_custom_call.1} parent=1 // pred_check_branch
      %224 = sbr.rel (0) target = $region13
    $region12: #{tpu_custom_call.1} parent=1 // pred_region
      _
    $region13: #{tpu_custom_call.1} parent=1 // pred_fallthru
      _
    // Predicated region
    $region14: #{tpu_custom_call.1} parent=1 // pred_check
      _
    $region15: #{tpu_custom_call.1} parent=1 // pred_check_branch
      %226 = sbr.rel (0) target = $region17
    $region16: #{tpu_custom_call.1} parent=1 // pred_region
      _
    $region17: #{tpu_custom_call.1} parent=1 // pred_fallthru
      _
    %227 = vsyncpa [#allocation3], 1

</llo_original>
